<compile_context>
chip_gen: v5e
topology: v5e:2x2
jax: 0.10.0
libtpu: 0.0.40
codegen_flags: <defaults>
</compile_context>

<pallas_src>
import jax
import jax.numpy as jnp
from jax.experimental import pallas as pl
from jax.experimental.pallas import tpu as pltpu

R = 256            # in_features
OUTPUT_SIZE = 512  # out_features


def linear_kernel(x_ref, w_ref, b_ref, o_ref):
    # x_ref: (tm, R), w_ref: (R, N), b_ref: (1, N), o_ref: (tm, N)
    acc = jnp.dot(x_ref[...], w_ref[...], preferred_element_type=jnp.float32)
    o_ref[...] = (acc + b_ref[...]).astype(o_ref.dtype)


def linear_pallas(x, w, b, *, small_batch_threshold=512, tm_large=512):
    """x: (B, R) f32, w: (R, OUT) f32, b: (OUT,) f32 -> (B, OUT) f32."""
    B, K = x.shape
    K2, N = w.shape
    assert K == K2, f"in_features mismatch: {K} vs {K2}"
    assert b.shape == (N,)
    b2d = b.reshape(1, N)

    if B <= small_batch_threshold:
        # Single grid point: everything in VMEM, one DMA per operand, no
        # per-step pipeline overhead, full-width (lane-dense) output store.
        return pl.pallas_call(
            linear_kernel,
            out_shape=jax.ShapeDtypeStruct((B, N), x.dtype),
            grid_spec=pltpu.PrefetchScalarGridSpec(
                num_scalar_prefetch=0,
                grid=(1,),
                in_specs=[
                    pl.BlockSpec((B, K), lambda i: (0, 0)),   # full x
                    pl.BlockSpec((K, N), lambda i: (0, 0)),   # full weight
                    pl.BlockSpec((1, N), lambda i: (0, 0)),   # full bias
                ],
                out_specs=pl.BlockSpec((B, N), lambda i: (0, 0)),  # full output
            ),
            compiler_params=pltpu.CompilerParams(
                dimension_semantics=("arbitrary",),
            ),
        )(x, w, b2d)

    # Large-batch path: tile rows, keep K unsplit and N full-width.
    # Weight / bias block index stays (0, 0) across row tiles -> fetched once.
    tm = tm_large
    num_row_tiles = pl.cdiv(B, tm)
    Bp = num_row_tiles * tm
    x_p = x if Bp == B else jnp.pad(x, ((0, Bp - B), (0, 0)))
    out = pl.pallas_call(
        linear_kernel,
        out_shape=jax.ShapeDtypeStruct((Bp, N), x.dtype),
        grid_spec=pltpu.PrefetchScalarGridSpec(
            num_scalar_prefetch=0,
            grid=(num_row_tiles,),
            in_specs=[
                pl.BlockSpec((tm, K), lambda i: (i, 0)),  # row tile of x
                pl.BlockSpec((K, N), lambda i: (0, 0)),   # weight (constant index)
                pl.BlockSpec((1, N), lambda i: (0, 0)),   # bias   (constant index)
            ],
            out_specs=pl.BlockSpec((tm, N), lambda i: (i, 0)),
        ),
        compiler_params=pltpu.CompilerParams(
            dimension_semantics=("parallel",),
        ),
    )(x_p, w, b2d)
    return out[:B]


if __name__ == "__main__":
    key = jax.random.PRNGKey(0)
    kx, kw, kb = jax.random.split(key, 3)

    batch = 8
    x = jax.random.normal(kx, (batch, R), dtype=jnp.float32)

    # Deterministic parameter init mimicking PyTorch nn.Linear:
    # U(-1/sqrt(in_features), 1/sqrt(in_features))
    bound = 1.0 / (R ** 0.5)
    w_torch_layout = jax.random.uniform(
        kw, (OUTPUT_SIZE, R), minval=-bound, maxval=bound, dtype=jnp.float32
    )
    b_param = jax.random.uniform(
        kb, (OUTPUT_SIZE,), minval=-bound, maxval=bound, dtype=jnp.float32
    )
    w_kernel = w_torch_layout.T  # (R, OUTPUT_SIZE) for x @ W layout

    out = linear_pallas(x, w_kernel, b_param)
    out = jax.block_until_ready(out)

    # Reference check against plain JAX (same math as torch's x @ W.T + b)
    ref = x @ w_torch_layout.T + b_param
    assert out.shape == (batch, OUTPUT_SIZE)
    assert jnp.allclose(out, ref, atol=1e-4, rtol=1e-4)

    # Exercise the large-batch (row-tiled, non-divisible) path too.
    big_batch = 600  # not a multiple of tm_large -> padded path
    xb = jax.random.normal(kx, (big_batch, R), dtype=jnp.float32)
    out_b = jax.block_until_ready(linear_pallas(xb, w_kernel, b_param))
    ref_b = xb @ w_torch_layout.T + b_param
    assert out_b.shape == (big_batch, OUTPUT_SIZE)
    assert jnp.allclose(out_b, ref_b, atol=1e-4, rtol=1e-4)

    print("KERNEL_OK")
</pallas_src>

<mosaic_0001>
module attributes {stable_mosaic.version = 11 : i64} {
  func.func @linear_kernel(%arg0: i32, %arg1: memref<8x256xf32, #tpu.memory_space<vmem>>, %arg2: memref<256x512xf32, #tpu.memory_space<vmem>>, %arg3: memref<1x512xf32, #tpu.memory_space<vmem>>, %arg4: memref<8x512xf32, #tpu.memory_space<vmem>>) attributes {dimension_semantics = [#tpu.dimension_semantics<arbitrary>], iteration_bounds = array<i64: 1>, scalar_prefetch = 0 : i64, scratch_operands = 0 : i64, tpu.core_type = #tpu.core_type<tc>, window_params = [{pipeline_mode = #tpu.pipeline_mode<synchronous>, transform_indices = @transform_0, window_bounds = array<i64: 8, 256>}, {pipeline_mode = #tpu.pipeline_mode<synchronous>, transform_indices = @transform_1, window_bounds = array<i64: 256, 512>}, {pipeline_mode = #tpu.pipeline_mode<synchronous>, transform_indices = @transform_2, window_bounds = array<i64: 1, 512>}, {pipeline_mode = #tpu.pipeline_mode<synchronous>, transform_indices = @transform_3, window_bounds = array<i64: 8, 512>}]} {
    %c0 = arith.constant 0 : index
    %c0_0 = arith.constant 0 : index
    %0 = vector.load %arg1[%c0, %c0_0] : memref<8x256xf32, #tpu.memory_space<vmem>>, vector<8x256xf32>
    %c0_1 = arith.constant 0 : index
    %c0_2 = arith.constant 0 : index
    %1 = vector.load %arg2[%c0_1, %c0_2] : memref<256x512xf32, #tpu.memory_space<vmem>>, vector<256x512xf32>
    %cst = arith.constant dense<0.000000e+00> : vector<8x512xf32>
    %2 = tpu.matmul %0, %1, %cst {dimension_numbers = #tpu.dot_dimension_numbers<[1], [0], [0], [1], [0, 0, 1, 1], [], []>} : vector<8x256xf32>, vector<256x512xf32>, vector<8x512xf32> -> vector<8x512xf32>
    %c0_3 = arith.constant 0 : index
    %c0_4 = arith.constant 0 : index
    %3 = vector.load %arg3[%c0_3, %c0_4] : memref<1x512xf32, #tpu.memory_space<vmem>>, vector<1x512xf32>
    %4 = vector.broadcast %3 : vector<1x512xf32> to vector<8x512xf32>
    %5 = arith.addf %2, %4 : vector<8x512xf32>
    %c0_5 = arith.constant 0 : index
    %c0_6 = arith.constant 0 : index
    %6 = vector.load %arg4[%c0_5, %c0_6] : memref<8x512xf32, #tpu.memory_space<vmem>>, vector<8x512xf32>
    tpu.vector_store %arg4[%c0_5, %c0_6], %5 {strides = array<i32>} : memref<8x512xf32, #tpu.memory_space<vmem>>, vector<8x512xf32>,
    return
  }
  func.func @transform_0(%arg0: i32) -> (i32, i32) {
    %c0_i32 = arith.constant 0 : i32
    %c0_i32_0 = arith.constant 0 : i32
    %c0_i32_1 = arith.constant 0 : i32
    return %c0_i32, %c0_i32_0 : i32, i32
  }
  func.func @transform_1(%arg0: i32) -> (i32, i32) {
    %c0_i32 = arith.constant 0 : i32
    %c0_i32_0 = arith.constant 0 : i32
    %c0_i32_1 = arith.constant 0 : i32
    return %c0_i32, %c0_i32_0 : i32, i32
  }
  func.func @transform_2(%arg0: i32) -> (i32, i32) {
    %c0_i32 = arith.constant 0 : i32
    %c0_i32_0 = arith.constant 0 : i32
    %c0_i32_1 = arith.constant 0 : i32
    return %c0_i32, %c0_i32_0 : i32, i32
  }
  func.func @transform_3(%arg0: i32) -> (i32, i32) {
    %c0_i32 = arith.constant 0 : i32
    %c0_i32_0 = arith.constant 0 : i32
    %c0_i32_1 = arith.constant 0 : i32
    return %c0_i32, %c0_i32_0 : i32, i32
  }
}

</mosaic_0001>

<llo_original>
// kernel: tpu_custom_call.1
$region0: #{tpu_custom_call.1}
  #allocation0 [shape = 'u32[]', space=smem, size = 0x4, offset = 0x4, fixed_abs, tag = 'smem constant byte address 0x4 - core index']
  #allocation1 [shape = 'u32[72,128]{1,0:T(1,128)}', space=vmem, size = 0x9000, scoped, tag = 'internal scratch']
  %s0 = inlined_call_operand.hbm [shape: f32[8,256], index: 0, kind: input, shape index: {}]
  %s1 = inlined_call_operand.hbm [shape: f32[256,512], index: 1, kind: input, shape index: {}]
  %s2 = inlined_call_operand.hbm [shape: f32[1,512], index: 2, kind: input, shape index: {}]
  %s3 = inlined_call_operand.hbm [shape: f32[8,512], index: 3, kind: output, shape index: {}]
  %s4 = sld [smem:[#allocation0]]
  $region34: #{tpu_custom_call.1} parent=0
    _
  %s6 = ssub.s32 1, %s4
  %s7 = scalar_select 0, %s6, %s4
  $region1: #{tpu_custom_call.1} parent=0
    #allocation2 [shape = 'u8[8192]{0}', space=vmem, size = 0x2000, scoped, tag = 'input window, operand 0, single buffered']
    #allocation3 [shape = 's32[1]{0}', space=sflag, size = 0x4, scoped, tag = 'scoped memory for tpu_custom_call.1']
    #allocation4 [shape = 's32[1]{0}', space=sflag, size = 0x4, scoped, tag = 'scoped memory for tpu_custom_call.1']
    #allocation5 [shape = 'u8[524288]{0}', space=vmem, size = 0x80000, scoped, tag = 'input window, operand 1, single buffered']
    #allocation6 [shape = 's32[1]{0}', space=sflag, size = 0x4, scoped, tag = 'scoped memory for tpu_custom_call.1']
    #allocation7 [shape = 'u8[2048]{0}', space=vmem, size = 0x800, scoped, tag = 'input window, operand 2, single buffered']
    #allocation8 [shape = 'u8[16384]{0}', space=vmem, size = 0x4000, scoped, tag = 'output window, operand 0, single buffered']
    %8 = vsyncpa [#allocation3], 0
    %9 = vsyncpa [#allocation6], 0
    %10 = vsyncpa [#allocation4], 0
    // Predicated region
    $region2: #{tpu_custom_call.1} parent=1 // pred_check
      _
    $region3: #{tpu_custom_call.1} parent=1 // pred_check_branch
      %12 = sbr.rel (0) target = $region5
    $region4: #{tpu_custom_call.1} parent=1 // pred_region
      %14 = vsyncadd [#allocation3], 0
      %s16 = sshll.u32 %s0, 4
      %s17 = int_to_ptr.hbm [resolvable:$true] %s16
      %s18 = sshll.u32 [#allocation2], 4
      %s19 = int_to_ptr.vmem [resolvable:$true] %s18
      %21 = dma.hbm_to_vmem [thread:$0]  %s17, 256, %s19, [#allocation3]
    $region5: #{tpu_custom_call.1} parent=1 // pred_fallthru
      _
    // Predicated region
    $region6: #{tpu_custom_call.1} parent=1 // pred_check
      _
    $region7: #{tpu_custom_call.1} parent=1 // pred_check_branch
      %23 = sbr.rel (0) target = $region9
    $region8: #{tpu_custom_call.1} parent=1 // pred_region
      %25 = vsyncadd [#allocation6], 0
      %s26 = sshll.u32 %s1, 4
      %s27 = int_to_ptr.hbm [resolvable:$true] %s26
      %s28 = sshll.u32 [#allocation5], 4
      %s29 = int_to_ptr.vmem [resolvable:$true] %s28
      %34 = dma.hbm_to_vmem [thread:$0]  %s27, 16384, %s29, [#allocation6], 512, 512, 32
    $region9: #{tpu_custom_call.1} parent=1 // pred_fallthru
      _
    // Predicated region
    $region10: #{tpu_custom_call.1} parent=1 // pred_check
      _
    $region11: #{tpu_custom_call.1} parent=1 // pred_check_branch
      %36 = sbr.rel (0) target = $region13
    $region12: #{tpu_custom_call.1} parent=1 // pred_region
      %38 = vsyncadd [#allocation6], 0
      %s40 = sshll.u32 %s2, 4
      %s41 = int_to_ptr.hbm [resolvable:$true] %s40
      %s42 = sshll.u32 [#allocation7], 4
      %s43 = int_to_ptr.vmem [resolvable:$true] %s42
      %45 = dma.hbm_to_vmem [thread:$0]  %s41, 64, %s43, [#allocation6]
    $region13: #{tpu_custom_call.1} parent=1 // pred_fallthru
      _
    // Predicated region
    $region14: #{tpu_custom_call.1} parent=1 // pred_check
      _
    $region15: #{tpu_custom_call.1} parent=1 // pred_check_branch
      %47 = sbr.rel (0) target = $region17
    $region16: #{tpu_custom_call.1} parent=1 // pred_region
      %49 = dma.done [#allocation3], 256
    $region17: #{tpu_custom_call.1} parent=1 // pred_fallthru
      _
    // Predicated region
    $region18: #{tpu_custom_call.1} parent=1 // pred_check
      _
    $region19: #{tpu_custom_call.1} parent=1 // pred_check_branch
      %51 = sbr.rel (0) target = $region21
    $region20: #{tpu_custom_call.1} parent=1 // pred_region
      %53 = dma.done [#allocation6], 16384
    $region21: #{tpu_custom_call.1} parent=1 // pred_fallthru
      _
    // Predicated region
    $region22: #{tpu_custom_call.1} parent=1 // pred_check
      _
    $region23: #{tpu_custom_call.1} parent=1 // pred_check_branch
      %55 = sbr.rel (0) target = $region25
    $region24: #{tpu_custom_call.1} parent=1 // pred_region
      %57 = dma.done [#allocation6], 64
    $region25: #{tpu_custom_call.1} parent=1 // pred_fallthru
      _
    %v58 = vld [vmem:[#allocation2] sm:$0xff]
    %v59 = vld [vmem:[#allocation2 + $0x8] sm:$0xff]
    %v60 = vld [vmem:[#allocation5] sm:$0xff]
    %v61 = vld [vmem:[#allocation5 + $0x8] sm:$0xff]
    %v62 = vld [vmem:[#allocation5 + $0x10] sm:$0xff]
    %v63 = vld [vmem:[#allocation5 + $0x18] sm:$0xff]
    %v64 = vld [vmem:[#allocation5 + $0x20] sm:$0xff]
    %v65 = vld [vmem:[#allocation5 + $0x28] sm:$0xff]
    %v66 = vld [vmem:[#allocation5 + $0x30] sm:$0xff]
    %v67 = vld [vmem:[#allocation5 + $0x38] sm:$0xff]
    %v68 = vld [vmem:[#allocation5 + $0x40] sm:$0xff]
    %v69 = vld [vmem:[#allocation5 + $0x48] sm:$0xff]
    %v70 = vld [vmem:[#allocation5 + $0x50] sm:$0xff]
    %v71 = vld [vmem:[#allocation5 + $0x58] sm:$0xff]
    %v72 = vld [vmem:[#allocation5 + $0x60] sm:$0xff]
    %v73 = vld [vmem:[#allocation5 + $0x68] sm:$0xff]
    %v74 = vld [vmem:[#allocation5 + $0x70] sm:$0xff]
    %v75 = vld [vmem:[#allocation5 + $0x78] sm:$0xff]
    %v76 = vld [vmem:[#allocation5 + $0x80] sm:$0xff]
    %v77 = vld [vmem:[#allocation5 + $0x88] sm:$0xff]
    %v78 = vld [vmem:[#allocation5 + $0x90] sm:$0xff]
    %v79 = vld [vmem:[#allocation5 + $0x98] sm:$0xff]
    %v80 = vld [vmem:[#allocation5 + $0xa0] sm:$0xff]
    %v81 = vld [vmem:[#allocation5 + $0xa8] sm:$0xff]
    %v82 = vld [vmem:[#allocation5 + $0xb0] sm:$0xff]
    %v83 = vld [vmem:[#allocation5 + $0xb8] sm:$0xff]
    %v84 = vld [vmem:[#allocation5 + $0xc0] sm:$0xff]
    %v85 = vld [vmem:[#allocation5 + $0xc8] sm:$0xff]
    %v86 = vld [vmem:[#allocation5 + $0xd0] sm:$0xff]
    %v87 = vld [vmem:[#allocation5 + $0xd8] sm:$0xff]
    %v88 = vld [vmem:[#allocation5 + $0xe0] sm:$0xff]
    %v89 = vld [vmem:[#allocation5 + $0xe8] sm:$0xff]
    %v90 = vld [vmem:[#allocation5 + $0xf0] sm:$0xff]
    %v91 = vld [vmem:[#allocation5 + $0xf8] sm:$0xff]
    %v92 = vld [vmem:[#allocation5 + $0x100] sm:$0xff]
    %v93 = vld [vmem:[#allocation5 + $0x108] sm:$0xff]
    %v94 = vld [vmem:[#allocation5 + $0x110] sm:$0xff]
    %v95 = vld [vmem:[#allocation5 + $0x118] sm:$0xff]
    %v96 = vld [vmem:[#allocation5 + $0x120] sm:$0xff]
    %v97 = vld [vmem:[#allocation5 + $0x128] sm:$0xff]
    %v98 = vld [vmem:[#allocation5 + $0x130] sm:$0xff]
    %v99 = vld [vmem:[#allocation5 + $0x138] sm:$0xff]
    %v100 = vld [vmem:[#allocation5 + $0x140] sm:$0xff]
    %v101 = vld [vmem:[#allocation5 + $0x148] sm:$0xff]
    %v102 = vld [vmem:[#allocation5 + $0x150] sm:$0xff]
    %v103 = vld [vmem:[#allocation5 + $0x158] sm:$0xff]
    %v104 = vld [vmem:[#allocation5 + $0x160] sm:$0xff]
    %v105 = vld [vmem:[#allocation5 + $0x168] sm:$0xff]
    %v106 = vld [vmem:[#allocation5 + $0x170] sm:$0xff]
    %v107 = vld [vmem:[#allocation5 + $0x178] sm:$0xff]
    %v108 = vld [vmem:[#allocation5 + $0x180] sm:$0xff]
    %v109 = vld [vmem:[#allocation5 + $0x188] sm:$0xff]
    %v110 = vld [vmem:[#allocation5 + $0x190] sm:$0xff]
    %v111 = vld [vmem:[#allocation5 + $0x198] sm:$0xff]
    %v112 = vld [vmem:[#allocation5 + $0x1a0] sm:$0xff]
    %v113 = vld [vmem:[#allocation5 + $0x1a8] sm:$0xff]
    %v114 = vld [vmem:[#allocation5 + $0x1b0] sm:$0xff]
    %v115 = vld [vmem:[#allocation5 + $0x1b8] sm:$0xff]
    %v116 = vld [vmem:[#allocation5 + $0x1c0] sm:$0xff]
    %v117 = vld [vmem:[#allocation5 + $0x1c8] sm:$0xff]
    %v118 = vld [vmem:[#allocation5 + $0x1d0] sm:$0xff]
    %v119 = vld [vmem:[#allocation5 + $0x1d8] sm:$0xff]
    %v120 = vld [vmem:[#allocation5 + $0x1e0] sm:$0xff]
    %v121 = vld [vmem:[#allocation5 + $0x1e8] sm:$0xff]
    %v122 = vld [vmem:[#allocation5 + $0x1f0] sm:$0xff]
    %v123 = vld [vmem:[#allocation5 + $0x1f8] sm:$0xff]
    %v124 = vld [vmem:[#allocation5 + $0x200] sm:$0xff]
    %v125 = vld [vmem:[#allocation5 + $0x208] sm:$0xff]
    %v126 = vld [vmem:[#allocation5 + $0x210] sm:$0xff]
    %v127 = vld [vmem:[#allocation5 + $0x218] sm:$0xff]
    %v128 = vld [vmem:[#allocation5 + $0x220] sm:$0xff]
    %v129 = vld [vmem:[#allocation5 + $0x228] sm:$0xff]
    %v130 = vld [vmem:[#allocation5 + $0x230] sm:$0xff]
    %v131 = vld [vmem:[#allocation5 + $0x238] sm:$0xff]
    %v132 = vld [vmem:[#allocation5 + $0x240] sm:$0xff]
    %v133 = vld [vmem:[#allocation5 + $0x248] sm:$0xff]
    %v134 = vld [vmem:[#allocation5 + $0x250] sm:$0xff]
    %v135 = vld [vmem:[#allocation5 + $0x258] sm:$0xff]
    %v136 = vld [vmem:[#allocation5 + $0x260] sm:$0xff]
    %v137 = vld [vmem:[#allocation5 + $0x268] sm:$0xff]
    %v138 = vld [vmem:[#allocation5 + $0x270] sm:$0xff]
    %v139 = vld [vmem:[#allocation5 + $0x278] sm:$0xff]
    %v140 = vld [vmem:[#allocation5 + $0x280] sm:$0xff]
    %v141 = vld [vmem:[#allocation5 + $0x288] sm:$0xff]
    %v142 = vld [vmem:[#allocation5 + $0x290] sm:$0xff]
    %v143 = vld [vmem:[#allocation5 + $0x298] sm:$0xff]
    %v144 = vld [vmem:[#allocation5 + $0x2a0] sm:$0xff]
    %v145 = vld [vmem:[#allocation5 + $0x2a8] sm:$0xff]
    %v146 = vld [vmem:[#allocation5 + $0x2b0] sm:$0xff]
    %v147 = vld [vmem:[#allocation5 + $0x2b8] sm:$0xff]
    %v148 = vld [vmem:[#allocation5 + $0x2c0] sm:$0xff]
    %v149 = vld [vmem:[#allocation5 + $0x2c8] sm:$0xff]
    %v150 = vld [vmem:[#allocation5 + $0x2d0] sm:$0xff]
    %v151 = vld [vmem:[#allocation5 + $0x2d8] sm:$0xff]
    %v152 = vld [vmem:[#allocation5 + $0x2e0] sm:$0xff]
    %v153 = vld [vmem:[#allocation5 + $0x2e8] sm:$0xff]
    %v154 = vld [vmem:[#allocation5 + $0x2f0] sm:$0xff]
    %v155 = vld [vmem:[#allocation5 + $0x2f8] sm:$0xff]
    %v156 = vld [vmem:[#allocation5 + $0x300] sm:$0xff]
    %v157 = vld [vmem:[#allocation5 + $0x308] sm:$0xff]
    %v158 = vld [vmem:[#allocation5 + $0x310] sm:$0xff]
    %v159 = vld [vmem:[#allocation5 + $0x318] sm:$0xff]
    %v160 = vld [vmem:[#allocation5 + $0x320] sm:$0xff]
    %v161 = vld [vmem:[#allocation5 + $0x328] sm:$0xff]
    %v162 = vld [vmem:[#allocation5 + $0x330] sm:$0xff]
    %v163 = vld [vmem:[#allocation5 + $0x338] sm:$0xff]
    %v164 = vld [vmem:[#allocation5 + $0x340] sm:$0xff]
    %v165 = vld [vmem:[#allocation5 + $0x348] sm:$0xff]
    %v166 = vld [vmem:[#allocation5 + $0x350] sm:$0xff]
    %v167 = vld [vmem:[#allocation5 + $0x358] sm:$0xff]
    %v168 = vld [vmem:[#allocation5 + $0x360] sm:$0xff]
    %v169 = vld [vmem:[#allocation5 + $0x368] sm:$0xff]
    %v170 = vld [vmem:[#allocation5 + $0x370] sm:$0xff]
    %v171 = vld [vmem:[#allocation5 + $0x378] sm:$0xff]
    %v172 = vld [vmem:[#allocation5 + $0x380] sm:$0xff]
    %v173 = vld [vmem:[#allocation5 + $0x388] sm:$0xff]
    %v174 = vld [vmem:[#allocation5 + $0x390] sm:$0xff]
    %v175 = vld [vmem:[#allocation5 + $0x398] sm:$0xff]
    %v176 = vld [vmem:[#allocation5 + $0x3a0] sm:$0xff]
    %v177 = vld [vmem:[#allocation5 + $0x3a8] sm:$0xff]
    %v178 = vld [vmem:[#allocation5 + $0x3b0] sm:$0xff]
    %v179 = vld [vmem:[#allocation5 + $0x3b8] sm:$0xff]
    %v180 = vld [vmem:[#allocation5 + $0x3c0] sm:$0xff]
    %v181 = vld [vmem:[#allocation5 + $0x3c8] sm:$0xff]
    %v182 = vld [vmem:[#allocation5 + $0x3d0] sm:$0xff]
    %v183 = vld [vmem:[#allocation5 + $0x3d8] sm:$0xff]
    %v184 = vld [vmem:[#allocation5 + $0x3e0] sm:$0xff]
    %v185 = vld [vmem:[#allocation5 + $0x3e8] sm:$0xff]
    %v186 = vld [vmem:[#allocation5 + $0x3f0] sm:$0xff]
    %v187 = vld [vmem:[#allocation5 + $0x3f8] sm:$0xff]
    %v188 = vld [vmem:[#allocation7] sm:$0xf]
    %v190 = vperm.slane %v188, 0
    %v191 = vperm.slane %v188, 1
    %v192 = vperm.slane %v188, 2
    %v193 = vperm.slane %v188, 3
    %198 = vmatpush.msra.mxu0 %v120
    %199 = vmatpush.msra.mxu0 %v116
    %200 = vmatpush.msra.mxu0 %v112
    %201 = vmatpush.msra.mxu0 %v108
    %202 = vmatpush.msra.mxu0 %v104
    %203 = vmatpush.msra.mxu0 %v100
    %204 = vmatpush.msra.mxu0 %v96
    %205 = vmatpush.msra.mxu0 %v92
    %206 = vmatpush.msra.mxu0 %v88
    %207 = vmatpush.msra.mxu0 %v84
    %208 = vmatpush.msra.mxu0 %v80
    %209 = vmatpush.msra.mxu0 %v76
    %210 = vmatpush.msra.mxu0 %v72
    %211 = vmatpush.msra.mxu0 %v68
    %212 = vmatpush.msra.mxu0 %v64
    %213 = vmatpush.msra.mxu0 %v60
    %214 = vmatmul.f32.gmra.mxu0 %v58
    %v215 = vpop.f32.mrf.mxu0
    %v216 = vadd.f32 %v190, %v215
    %217 = vdwg.mxu0
    %218 = vmatpush.msra.mxu0 %v184
    %219 = vmatpush.msra.mxu0 %v180
    %220 = vmatpush.msra.mxu0 %v176
    %221 = vmatpush.msra.mxu0 %v172
    %222 = vmatpush.msra.mxu0 %v168
    %223 = vmatpush.msra.mxu0 %v164
    %224 = vmatpush.msra.mxu0 %v160
    %225 = vmatpush.msra.mxu0 %v156
    %226 = vmatpush.msra.mxu0 %v152
    %227 = vmatpush.msra.mxu0 %v148
    %228 = vmatpush.msra.mxu0 %v144
    %229 = vmatpush.msra.mxu0 %v140
    %230 = vmatpush.msra.mxu0 %v136
    %231 = vmatpush.msra.mxu0 %v132
    %232 = vmatpush.msra.mxu0 %v128
    %233 = vmatpush.msra.mxu0 %v124
    %234 = vmatmul.f32.gmra.mxu0 %v59
    %v235 = vpop.f32.mrf.mxu0
    %v236 = vadd.f32 %v216, %v235
    %237 = vdwg.mxu0
    %238 = vmatpush.msra.mxu0 %v121
    %239 = vmatpush.msra.mxu0 %v117
    %240 = vmatpush.msra.mxu0 %v113
    %241 = vmatpush.msra.mxu0 %v109
    %242 = vmatpush.msra.mxu0 %v105
    %243 = vmatpush.msra.mxu0 %v101
    %244 = vmatpush.msra.mxu0 %v97
    %245 = vmatpush.msra.mxu0 %v93
    %246 = vmatpush.msra.mxu0 %v89
    %247 = vmatpush.msra.mxu0 %v85
    %248 = vmatpush.msra.mxu0 %v81
    %249 = vmatpush.msra.mxu0 %v77
    %250 = vmatpush.msra.mxu0 %v73
    %251 = vmatpush.msra.mxu0 %v69
    %252 = vmatpush.msra.mxu0 %v65
    %253 = vmatpush.msra.mxu0 %v61
    %254 = vmatmul.f32.gmra.mxu0 %v58
    %v255 = vpop.f32.mrf.mxu0
    %v256 = vadd.f32 %v191, %v255
    %257 = vdwg.mxu0
    %258 = vmatpush.msra.mxu0 %v185
    %259 = vmatpush.msra.mxu0 %v181
    %260 = vmatpush.msra.mxu0 %v177
    %261 = vmatpush.msra.mxu0 %v173
    %262 = vmatpush.msra.mxu0 %v169
    %263 = vmatpush.msra.mxu0 %v165
    %264 = vmatpush.msra.mxu0 %v161
    %265 = vmatpush.msra.mxu0 %v157
    %266 = vmatpush.msra.mxu0 %v153
    %267 = vmatpush.msra.mxu0 %v149
    %268 = vmatpush.msra.mxu0 %v145
    %269 = vmatpush.msra.mxu0 %v141
    %270 = vmatpush.msra.mxu0 %v137
    %271 = vmatpush.msra.mxu0 %v133
    %272 = vmatpush.msra.mxu0 %v129
    %273 = vmatpush.msra.mxu0 %v125
    %274 = vmatmul.f32.gmra.mxu0 %v59
    %v275 = vpop.f32.mrf.mxu0
    %v276 = vadd.f32 %v256, %v275
    %277 = vdwg.mxu0
    %278 = vmatpush.msra.mxu0 %v122
    %279 = vmatpush.msra.mxu0 %v118
    %280 = vmatpush.msra.mxu0 %v114
    %281 = vmatpush.msra.mxu0 %v110
    %282 = vmatpush.msra.mxu0 %v106
    %283 = vmatpush.msra.mxu0 %v102
    %284 = vmatpush.msra.mxu0 %v98
    %285 = vmatpush.msra.mxu0 %v94
    %286 = vmatpush.msra.mxu0 %v90
    %287 = vmatpush.msra.mxu0 %v86
    %288 = vmatpush.msra.mxu0 %v82
    %289 = vmatpush.msra.mxu0 %v78
    %290 = vmatpush.msra.mxu0 %v74
    %291 = vmatpush.msra.mxu0 %v70
    %292 = vmatpush.msra.mxu0 %v66
    %293 = vmatpush.msra.mxu0 %v62
    %294 = vmatmul.f32.gmra.mxu0 %v58
    %v295 = vpop.f32.mrf.mxu0
    %v296 = vadd.f32 %v192, %v295
    %297 = vdwg.mxu0
    %298 = vmatpush.msra.mxu0 %v186
    %299 = vmatpush.msra.mxu0 %v182
    %300 = vmatpush.msra.mxu0 %v178
    %301 = vmatpush.msra.mxu0 %v174
    %302 = vmatpush.msra.mxu0 %v170
    %303 = vmatpush.msra.mxu0 %v166
    %304 = vmatpush.msra.mxu0 %v162
    %305 = vmatpush.msra.mxu0 %v158
    %306 = vmatpush.msra.mxu0 %v154
    %307 = vmatpush.msra.mxu0 %v150
    %308 = vmatpush.msra.mxu0 %v146
    %309 = vmatpush.msra.mxu0 %v142
    %310 = vmatpush.msra.mxu0 %v138
    %311 = vmatpush.msra.mxu0 %v134
    %312 = vmatpush.msra.mxu0 %v130
    %313 = vmatpush.msra.mxu0 %v126
    %314 = vmatmul.f32.gmra.mxu0 %v59
    %v315 = vpop.f32.mrf.mxu0
    %v316 = vadd.f32 %v296, %v315
    %317 = vdwg.mxu0
    %318 = vmatpush.msra.mxu0 %v123
    %319 = vmatpush.msra.mxu0 %v119
    %320 = vmatpush.msra.mxu0 %v115
    %321 = vmatpush.msra.mxu0 %v111
    %322 = vmatpush.msra.mxu0 %v107
    %323 = vmatpush.msra.mxu0 %v103
    %324 = vmatpush.msra.mxu0 %v99
    %325 = vmatpush.msra.mxu0 %v95
    %326 = vmatpush.msra.mxu0 %v91
    %327 = vmatpush.msra.mxu0 %v87
    %328 = vmatpush.msra.mxu0 %v83
    %329 = vmatpush.msra.mxu0 %v79
    %330 = vmatpush.msra.mxu0 %v75
    %331 = vmatpush.msra.mxu0 %v71
    %332 = vmatpush.msra.mxu0 %v67
    %333 = vmatpush.msra.mxu0 %v63
    %334 = vmatmul.f32.gmra.mxu0 %v58
    %v335 = vpop.f32.mrf.mxu0
    %v336 = vadd.f32 %v193, %v335
    %337 = vdwg.mxu0
    %338 = vmatpush.msra.mxu0 %v187
    %339 = vmatpush.msra.mxu0 %v183
    %340 = vmatpush.msra.mxu0 %v179
    %341 = vmatpush.msra.mxu0 %v175
    %342 = vmatpush.msra.mxu0 %v171
    %343 = vmatpush.msra.mxu0 %v167
    %344 = vmatpush.msra.mxu0 %v163
    %345 = vmatpush.msra.mxu0 %v159
    %346 = vmatpush.msra.mxu0 %v155
    %347 = vmatpush.msra.mxu0 %v151
    %348 = vmatpush.msra.mxu0 %v147
    %349 = vmatpush.msra.mxu0 %v143
    %350 = vmatpush.msra.mxu0 %v139
    %351 = vmatpush.msra.mxu0 %v135
    %352 = vmatpush.msra.mxu0 %v131
    %353 = vmatpush.msra.mxu0 %v127
    %354 = vmatmul.f32.gmra.mxu0 %v59
    %v355 = vpop.f32.mrf.mxu0
    %v356 = vadd.f32 %v336, %v355
    %357 = vdwg.mxu0
    %358 = vst [vmem:[#allocation8] sm:$0xff] %v236
    %359 = vst [vmem:[#allocation8 + $0x8] sm:$0xff] %v276
    %360 = vst [vmem:[#allocation8 + $0x10] sm:$0xff] %v316
    %361 = vst [vmem:[#allocation8 + $0x18] sm:$0xff] %v356
    // Predicated region
    $region26: #{tpu_custom_call.1} parent=1 // pred_check
      _
    $region27: #{tpu_custom_call.1} parent=1 // pred_check_branch
      %363 = sbr.rel (0) target = $region29
    $region28: #{tpu_custom_call.1} parent=1 // pred_region
      %365 = vsyncadd [#allocation4], 0
      %s367 = sshll.u32 [#allocation8], 4
      %s368 = int_to_ptr.vmem [resolvable:$true] %s367
      %s369 = sshll.u32 %s3, 4
      %s370 = int_to_ptr.hbm [resolvable:$true] %s369
      %372 = dma.vmem_to_hbm [thread:$0]  %s368, 512, %s370, [#allocation4]
    $region29: #{tpu_custom_call.1} parent=1 // pred_fallthru
      _
    // Predicated region
    $region30: #{tpu_custom_call.1} parent=1 // pred_check
      _
    $region31: #{tpu_custom_call.1} parent=1 // pred_check_branch
      %374 = sbr.rel (0) target = $region33
    $region32: #{tpu_custom_call.1} parent=1 // pred_region
      %376 = dma.done [#allocation4], 512
    $region33: #{tpu_custom_call.1} parent=1 // pred_fallthru
      _
    %377 = vsyncpa [#allocation3], 1
    %378 = vsyncpa [#allocation6], 1
    %379 = vsyncpa [#allocation4], 1

</llo_original>
